<compile_context>
chip_gen: v7x
topology: tpu7x:2x2x1
jax: 0.10.0
libtpu: 0.0.40
codegen_flags: <defaults>
</compile_context>

<pallas_src>
import math
import functools

import jax
import jax.numpy as jnp
from jax import lax
from jax.experimental import pallas as pl
from jax.experimental.pallas import tpu as pltpu


def _mha_kernel(x_ref, wqkv_ref, bqkv_ref, wo_ref, bo_ref, o_ref, acc_ref, *,
                num_heads, head_dim, mxu_dtype, approx_recip):
    """One (batch b, head h) grid step.

    Blocks:
      x_ref    : (1, S, E)   input sequence for batch b (f32)
      wqkv_ref : (1, E, 3D)  fused per-head [Wq|Wk|Wv] weights (mxu_dtype)
      bqkv_ref : (1, 1, 3D)  fused per-head [bq|bk|bv] biases (f32)
      wo_ref   : (1, D, E)   per-head row-slice of the output projection (mxu_dtype)
      bo_ref   : (1, E)      output projection bias (f32)
      o_ref    : (1, S, E)   output for batch b (written on the last head)
      acc_ref  : (S, E) f32  VMEM scratch accumulating the output projection
    """
    h = pl.program_id(1)
    D = head_dim

    @pl.when(h == 0)
    def _():
        acc_ref[...] = jnp.zeros_like(acc_ref)

    x = x_ref[0].astype(mxu_dtype)                                  # (S, E)

    # Fused Q/K/V projection: a single MXU pass with N = 3D.
    qkv = jnp.dot(x, wqkv_ref[0], preferred_element_type=jnp.float32)
    qkv = qkv + bqkv_ref[0]                                         # (S, 3D) f32

    # Fold 1/sqrt(D) into q (S*D multiplies instead of S*S on the scores).
    q = qkv[:, 0 * D:1 * D] * (1.0 / math.sqrt(D))                  # (S, D)
    k = qkv[:, 1 * D:2 * D]                                         # (S, D)
    v = qkv[:, 2 * D:3 * D]                                         # (S, D)

    # scores: contract the D axis directly -- no materialized k.T relayout.
    s = lax.dot_general(q.astype(mxu_dtype), k.astype(mxu_dtype),
                        dimension_numbers=(((1,), (1,)), ((), ())),
                        preferred_element_type=jnp.float32)         # (S, S)

    # Numerically stable softmax, kept in f32 (v5e VPU/EUP have no bf16).
    s = s - jnp.max(s, axis=-1, keepdims=True)
    p = jnp.exp(s)
    inv_denom = pl.reciprocal(jnp.sum(p, axis=-1, keepdims=True),
                              approx=approx_recip)                  # (S, 1), EUP
    # dropout(p=0.0) is identity -> skip.

    # Unnormalized context; normalization folded in afterwards (S*D mults).
    ctx = jnp.dot(p.astype(mxu_dtype), v.astype(mxu_dtype),
                  preferred_element_type=jnp.float32) * inv_denom   # (S, D) f32

    # Per-head slice of the output projection, accumulated across heads
    # (replaces concat(heads) @ Wo).
    acc_ref[...] += jnp.dot(ctx.astype(mxu_dtype), wo_ref[0],
                            preferred_element_type=jnp.float32)

    @pl.when(h == num_heads - 1)
    def _():
        o_ref[0] = (acc_ref[...] + bo_ref[...]).astype(o_ref.dtype)


def _pack_params(params, num_heads, mxu_dtype):
    """Repack (E, E)/(1, E) linear params into per-head fused tensors.

    wqkv: (H, E, 3D)  head h holds [Wq_h | Wk_h | Wv_h] in (in, out) layout
    bqkv: (H, 1, 3D)
    wo_h: (H, D, E)   head h holds rows [h*D:(h+1)*D] of Wo
    bo  : (1, E)
    (In a real model this packing happens once at parameter-load time.)
    """
    E = params["wq"].shape[0]
    H = num_heads
    D = E // H

    def per_head_cols(w):            # (E, E) -> (H, E, D)
        return jnp.transpose(w.reshape(E, H, D), (1, 0, 2))

    wqkv = jnp.concatenate(
        [per_head_cols(params["wq"]),
         per_head_cols(params["wk"]),
         per_head_cols(params["wv"])], axis=-1).astype(mxu_dtype)      # (H, E, 3D)
    bqkv = jnp.concatenate(
        [params["bq"].reshape(H, 1, D),
         params["bk"].reshape(H, 1, D),
         params["bv"].reshape(H, 1, D)], axis=-1).astype(jnp.float32)  # (H, 1, 3D)
    wo_h = params["wo"].reshape(H, D, E).astype(mxu_dtype)             # (H, D, E)
    bo = params["bo"].astype(jnp.float32)                              # (1, E)
    return wqkv, bqkv, wo_h, bo


def multi_head_attention(x, params, *, num_heads, mxu_dtype=jnp.bfloat16):
    """x: (B, S, E) float32. params: dict with wq/bq/wk/bk/wv/bv/wo/bo.

    Weights are (E, E) already transposed to (in, out); biases are (1, E).
    mxu_dtype: operand dtype for MXU matmuls (accumulation always f32);
               pass jnp.float32 for an exact / reference-precision path.
    """
    B, S, E = x.shape
    H = num_heads
    D = E // H
    assert D * H == E, "embed_dim must be divisible by num_heads"

    wqkv, bqkv, wo_h, bo = _pack_params(params, H, mxu_dtype)

    kernel = functools.partial(
        _mha_kernel, num_heads=H, head_dim=D, mxu_dtype=mxu_dtype,
        approx_recip=(mxu_dtype != jnp.float32))

    # At this tiling only per-head weight slices ((E, 3D) and (D, E)) are
    # resident per step, so default double-buffering prefetches the *next*
    # head's weights instead of wasting VMEM on constant (E, E) matrices.
    # TODO(synk): for very long sequences (esp. v7x 64 MiB VMEM) add a KV-tile
    # grid axis with an online-softmax (flash-style) inner loop.
    return pl.pallas_call(
        kernel,
        out_shape=jax.ShapeDtypeStruct((B, S, E), x.dtype),
        grid_spec=pltpu.PrefetchScalarGridSpec(
            num_scalar_prefetch=0,
            grid=(B, H),                       # heads = innermost reduction axis
            in_specs=[
                pl.BlockSpec((1, S, E), lambda b, h: (b, 0, 0)),       # x
                pl.BlockSpec((1, E, 3 * D), lambda b, h: (h, 0, 0)),   # wqkv
                pl.BlockSpec((1, 1, 3 * D), lambda b, h: (h, 0, 0)),   # bqkv
                pl.BlockSpec((1, D, E), lambda b, h: (h, 0, 0)),       # wo
                pl.BlockSpec((1, E), lambda b, h: (0, 0)),             # bo
            ],
            out_specs=pl.BlockSpec((1, S, E), lambda b, h: (b, 0, 0)),
            scratch_shapes=[pltpu.VMEM((S, E), jnp.float32)],
        ),
        compiler_params=pltpu.CompilerParams(
            dimension_semantics=("parallel", "arbitrary")),
    )(x, wqkv, bqkv, wo_h, bo)


def _xavier_uniform(key, fan_in, fan_out, dtype=jnp.float32):
    bound = math.sqrt(6.0 / (fan_in + fan_out))
    return jax.random.uniform(key, (fan_out, fan_in), dtype, -bound, bound)


def init_params(key, embed_dim):
    # PyTorch nn.Linear stores weight as (out, in); xavier_uniform_ on that.
    # Bias default init: U(-1/sqrt(in), 1/sqrt(in)).
    keys = jax.random.split(key, 8)
    bb = 1.0 / math.sqrt(embed_dim)
    params = {}
    for i, name in enumerate(["q", "k", "v", "o"]):
        w_pt = _xavier_uniform(keys[2 * i], embed_dim, embed_dim)       # (out, in)
        b = jax.random.uniform(keys[2 * i + 1], (1, embed_dim),
                               jnp.float32, -bb, bb)
        params[f"w{name}"] = jnp.transpose(w_pt)   # (in, out) for x @ W
        params[f"b{name}"] = b
    return params


def _reference(x, params, num_heads):
    # Pure-JAX reference replicating the PyTorch forward (mask=None, dropout=0)
    B, S, E = x.shape
    D = E // num_heads
    q = x @ params["wq"] + params["bq"]
    k = x @ params["wk"] + params["bk"]
    v = x @ params["wv"] + params["bv"]

    def split(t):
        return t.reshape(B, S, num_heads, D).transpose(0, 2, 1, 3)

    q, k, v = split(q), split(k), split(v)
    scores = jnp.einsum("bhqd,bhkd->bhqk", q, k) / math.sqrt(D)
    attn = jax.nn.softmax(scores, axis=-1)
    ctx = jnp.einsum("bhqk,bhkd->bhqd", attn, v)
    ctx = ctx.transpose(0, 2, 1, 3).reshape(B, S, E)
    return ctx @ params["wo"] + params["bo"]


if __name__ == "__main__":
    B, S, E, H = 2, 8, 32, 4

    key = jax.random.PRNGKey(0)
    k_x, k_p = jax.random.split(key)
    x = jax.random.normal(k_x, (B, S, E), jnp.float32)
    params = init_params(k_p, E)

    ref = _reference(x, params, H)

    # Exact-precision path (f32 MXU operands, exact reciprocal): tight check.
    out_f32 = multi_head_attention(x, params, num_heads=H, mxu_dtype=jnp.float32)
    out_f32 = jax.block_until_ready(out_f32)
    assert out_f32.shape == (B, S, E)
    assert jnp.allclose(out_f32, ref, atol=2e-4, rtol=2e-4), (
        "f32 path max err = %g" % float(jnp.max(jnp.abs(out_f32 - ref))))

    # Performance path (bf16 MXU operands, f32 accumulation + f32 softmax).
    out_bf16 = multi_head_attention(x, params, num_heads=H, mxu_dtype=jnp.bfloat16)
    out_bf16 = jax.block_until_ready(out_bf16)
    assert out_bf16.shape == (B, S, E)
    assert jnp.allclose(out_bf16, ref, atol=1e-1, rtol=1e-1), (
        "bf16 path max err = %g" % float(jnp.max(jnp.abs(out_bf16 - ref))))

    print("KERNEL_OK")
</pallas_src>

<mosaic_0001>
module attributes {stable_mosaic.version = 11 : i64} {
  func.func @_mha_kernel(%arg0: i32, %arg1: i32, %arg2: memref<1x8x32xf32, #tpu.memory_space<vmem>>, %arg3: memref<1x32x24xf32, #tpu.memory_space<vmem>>, %arg4: memref<1x1x24xf32, #tpu.memory_space<vmem>>, %arg5: memref<1x8x32xf32, #tpu.memory_space<vmem>>, %arg6: memref<1x32xf32, #tpu.memory_space<vmem>>, %arg7: memref<1x8x32xf32, #tpu.memory_space<vmem>>, %arg8: memref<8x32xf32, #tpu.memory_space<vmem>>) attributes {dimension_semantics = [#tpu.dimension_semantics<parallel>, #tpu.dimension_semantics<arbitrary>], iteration_bounds = array<i64: 2, 4>, scalar_prefetch = 0 : i64, scratch_operands = 1 : i64, tpu.core_type = #tpu.core_type<tc>, window_params = [{transform_indices = @transform_0, window_bounds = array<i64: 1, 8, 32>}, {transform_indices = @transform_1, window_bounds = array<i64: 1, 32, 24>}, {transform_indices = @transform_2, window_bounds = array<i64: 1, 1, 24>}, {transform_indices = @transform_3, window_bounds = array<i64: 1, 8, 32>}, {pipeline_mode = #tpu.pipeline_mode<synchronous>, transform_indices = @transform_4, window_bounds = array<i64: 1, 32>}, {transform_indices = @transform_5, window_bounds = array<i64: 1, 8, 32>}]} {
    %c0_i32 = arith.constant 0 : i32
    %0 = arith.cmpi eq, %arg1, %c0_i32 : i32
    %1 = arith.extui %0 : i1 to i32
    %c0_i32_0 = arith.constant 0 : i32
    %2 = arith.cmpi ne, %1, %c0_i32_0 : i32
    scf.if %2 {
      %cst_23 = arith.constant 0.000000e+00 : f32
      %38 = vector.broadcast %cst_23 : f32 to vector<8x32xf32>
      %c0_24 = arith.constant 0 : index
      %c0_25 = arith.constant 0 : index
      %39 = vector.load %arg8[%c0_24, %c0_25] : memref<8x32xf32, #tpu.memory_space<vmem>>, vector<8x32xf32>
      tpu.vector_store %arg8[%c0_24, %c0_25], %38 {strides = array<i32>} : memref<8x32xf32, #tpu.memory_space<vmem>>, vector<8x32xf32>,
    } else {
    }
    %c0 = arith.constant 0 : index
    %c0_1 = arith.constant 0 : index
    %c0_2 = arith.constant 0 : index
    %3 = vector.load %arg2[%c0, %c0_1, %c0_2] : memref<1x8x32xf32, #tpu.memory_space<vmem>>, vector<1x8x32xf32>
    %4 = vector.shape_cast %3 : vector<1x8x32xf32> to vector<8x32xf32>
    %c0_3 = arith.constant 0 : index
    %c0_4 = arith.constant 0 : index
    %c0_5 = arith.constant 0 : index
    %5 = vector.load %arg3[%c0_3, %c0_4, %c0_5] : memref<1x32x24xf32, #tpu.memory_space<vmem>>, vector<1x32x24xf32>
    %6 = vector.shape_cast %5 : vector<1x32x24xf32> to vector<32x24xf32>
    %cst = arith.constant dense<0.000000e+00> : vector<8x24xf32>
    %7 = tpu.matmul %4, %6, %cst {dimension_numbers = #tpu.dot_dimension_numbers<[1], [0], [0], [1], [0, 0, 1, 1], [], []>} : vector<8x32xf32>, vector<32x24xf32>, vector<8x24xf32> -> vector<8x24xf32>
    %c0_6 = arith.constant 0 : index
    %c0_7 = arith.constant 0 : index
    %c0_8 = arith.constant 0 : index
    %8 = vector.load %arg4[%c0_6, %c0_7, %c0_8] : memref<1x1x24xf32, #tpu.memory_space<vmem>>, vector<1x1x24xf32>
    %9 = vector.shape_cast %8 : vector<1x1x24xf32> to vector<1x24xf32>
    %10 = vector.broadcast %9 : vector<1x24xf32> to vector<8x24xf32>
    %11 = arith.addf %7, %10 : vector<8x24xf32>
    %12 = vector.extract_strided_slice %11 {offsets = [0, 0], sizes = [8, 8], strides = [1, 1]} : vector<8x24xf32> to vector<8x8xf32>
    %cst_9 = arith.constant 0.353553385 : f32
    %13 = vector.broadcast %cst_9 : f32 to vector<8x8xf32>
    %14 = arith.mulf %12, %13 : vector<8x8xf32>
    %15 = vector.extract_strided_slice %11 {offsets = [0, 8], sizes = [8, 8], strides = [1, 1]} : vector<8x24xf32> to vector<8x8xf32>
    %16 = vector.extract_strided_slice %11 {offsets = [0, 16], sizes = [8, 8], strides = [1, 1]} : vector<8x24xf32> to vector<8x8xf32>
    %cst_10 = arith.constant dense<0.000000e+00> : vector<8x8xf32>
    %17 = tpu.matmul %14, %15, %cst_10 {dimension_numbers = #tpu.dot_dimension_numbers<[1], [1], [0], [0], [0, 0, 1, 0], [], []>} : vector<8x8xf32>, vector<8x8xf32>, vector<8x8xf32> -> vector<8x8xf32>
    %cst_11 = arith.constant dense<0xFF800000> : vector<8xf32>
    %18 = vector.multi_reduction <maximumf>, %17, %cst_11 [1] : vector<8x8xf32> to vector<8xf32>
    %19 = vector.shape_cast %18 : vector<8xf32> to vector<8x1xf32>
    %20 = vector.broadcast %19 : vector<8x1xf32> to vector<8x8xf32>
    %21 = arith.subf %17, %20 : vector<8x8xf32>
    %22 = math.exp %21 : vector<8x8xf32>
    %cst_12 = arith.constant dense<0.000000e+00> : vector<8xf32>
    %23 = vector.multi_reduction <add>, %22, %cst_12 [1] : vector<8x8xf32> to vector<8xf32>
    %24 = vector.shape_cast %23 : vector<8xf32> to vector<8x1xf32>
    %25 = tpu.reciprocal %24 : vector<8x1xf32> -> vector<8x1xf32>
    %cst_13 = arith.constant dense<0.000000e+00> : vector<8x8xf32>
    %26 = tpu.matmul %22, %16, %cst_13 {dimension_numbers = #tpu.dot_dimension_numbers<[1], [0], [0], [1], [0, 0, 1, 1], [], []>} : vector<8x8xf32>, vector<8x8xf32>, vector<8x8xf32> -> vector<8x8xf32>
    %27 = vector.broadcast %25 : vector<8x1xf32> to vector<8x8xf32>
    %28 = arith.mulf %26, %27 : vector<8x8xf32>
    %c0_14 = arith.constant 0 : index
    %c0_15 = arith.constant 0 : index
    %29 = vector.load %arg8[%c0_14, %c0_15] : memref<8x32xf32, #tpu.memory_space<vmem>>, vector<8x32xf32>
    %c0_16 = arith.constant 0 : index
    %c0_17 = arith.constant 0 : index
    %c0_18 = arith.constant 0 : index
    %30 = vector.load %arg5[%c0_16, %c0_17, %c0_18] : memref<1x8x32xf32, #tpu.memory_space<vmem>>, vector<1x8x32xf32>
    %31 = vector.shape_cast %30 : vector<1x8x32xf32> to vector<8x32xf32>
    %cst_19 = arith.constant dense<0.000000e+00> : vector<8x32xf32>
    %32 = tpu.matmul %28, %31, %cst_19 {dimension_numbers = #tpu.dot_dimension_numbers<[1], [0], [0], [1], [0, 0, 1, 1], [], []>} : vector<8x8xf32>, vector<8x32xf32>, vector<8x32xf32> -> vector<8x32xf32>
    %33 = arith.addf %29, %32 : vector<8x32xf32>
    %c0_20 = arith.constant 0 : index
    %c0_21 = arith.constant 0 : index
    %34 = vector.load %arg8[%c0_20, %c0_21] : memref<8x32xf32, #tpu.memory_space<vmem>>, vector<8x32xf32>
    tpu.vector_store %arg8[%c0_20, %c0_21], %33 {strides = array<i32>} : memref<8x32xf32, #tpu.memory_space<vmem>>, vector<8x32xf32>,
    %c3_i32 = arith.constant 3 : i32
    %35 = arith.cmpi eq, %arg1, %c3_i32 : i32
    %36 = arith.extui %35 : i1 to i32
    %c0_i32_22 = arith.constant 0 : i32
    %37 = arith.cmpi ne, %36, %c0_i32_22 : i32
    scf.if %37 {
      %c0_23 = arith.constant 0 : index
      %c0_24 = arith.constant 0 : index
      %38 = vector.load %arg8[%c0_23, %c0_24] : memref<8x32xf32, #tpu.memory_space<vmem>>, vector<8x32xf32>
      %c0_25 = arith.constant 0 : index
      %c0_26 = arith.constant 0 : index
      %39 = vector.load %arg6[%c0_25, %c0_26] : memref<1x32xf32, #tpu.memory_space<vmem>>, vector<1x32xf32>
      %40 = vector.broadcast %39 : vector<1x32xf32> to vector<8x32xf32>
      %41 = arith.addf %38, %40 : vector<8x32xf32>
      %c0_27 = arith.constant 0 : index
      %c0_28 = arith.constant 0 : index
      %c0_29 = arith.constant 0 : index
      %42 = vector.load %arg7[%c0_27, %c0_28, %c0_29] : memref<1x8x32xf32, #tpu.memory_space<vmem>>, vector<1x8x32xf32>
      %43 = vector.shape_cast %42 : vector<1x8x32xf32> to vector<8x32xf32>
      %44 = vector.shape_cast %41 : vector<8x32xf32> to vector<1x8x32xf32>
      tpu.vector_store %arg7[%c0_27, %c0_28, %c0_29], %44 {strides = array<i32>} : memref<1x8x32xf32, #tpu.memory_space<vmem>>, vector<1x8x32xf32>,
    } else {
    }
    return
  }
  func.func @transform_0(%arg0: i32, %arg1: i32) -> (i32, i32, i32) {
    %c0_i32 = arith.constant 0 : i32
    %c0_i32_0 = arith.constant 0 : i32
    %c0_i32_1 = arith.constant 0 : i32
    return %arg0, %c0_i32, %c0_i32_0 : i32, i32, i32
  }
  func.func @transform_1(%arg0: i32, %arg1: i32) -> (i32, i32, i32) {
    %c0_i32 = arith.constant 0 : i32
    %c0_i32_0 = arith.constant 0 : i32
    %c0_i32_1 = arith.constant 0 : i32
    return %arg1, %c0_i32, %c0_i32_0 : i32, i32, i32
  }
  func.func @transform_2(%arg0: i32, %arg1: i32) -> (i32, i32, i32) {
    %c0_i32 = arith.constant 0 : i32
    %c0_i32_0 = arith.constant 0 : i32
    %c0_i32_1 = arith.constant 0 : i32
    return %arg1, %c0_i32, %c0_i32_0 : i32, i32, i32
  }
  func.func @transform_3(%arg0: i32, %arg1: i32) -> (i32, i32, i32) {
    %c0_i32 = arith.constant 0 : i32
    %c0_i32_0 = arith.constant 0 : i32
    %c0_i32_1 = arith.constant 0 : i32
    return %arg1, %c0_i32, %c0_i32_0 : i32, i32, i32
  }
  func.func @transform_4(%arg0: i32, %arg1: i32) -> (i32, i32) {
    %c0_i32 = arith.constant 0 : i32
    %c0_i32_0 = arith.constant 0 : i32
    %c0_i32_1 = arith.constant 0 : i32
    return %c0_i32, %c0_i32_0 : i32, i32
  }
  func.func @transform_5(%arg0: i32, %arg1: i32) -> (i32, i32, i32) {
    %c0_i32 = arith.constant 0 : i32
    %c0_i32_0 = arith.constant 0 : i32
    %c0_i32_1 = arith.constant 0 : i32
    return %arg0, %c0_i32, %c0_i32_0 : i32, i32, i32
  }
}

</mosaic_0001>

<llo_original>
// kernel: tpu_custom_call.1
$region0: #{tpu_custom_call.1}
  #allocation0 [shape = 'u32[]', space=smem, size = 0x4, offset = 0x4, fixed_abs, tag = 'smem constant byte address 0x4 - core index']
  #allocation1 [shape = 'u32[144,128]{1,0:T(1,128)}', space=vmem, size = 0x12000, scoped, tag = 'internal scratch']
  #allocation2 [shape = 'f32[8,32]{1,0:T(8,128)}', space=vmem, size = 0x1000, scoped, tag = 'scratch operand']
  %s0 = inlined_call_operand.vmem [shape: f32[2,8,32], index: 0, kind: input, shape index: {}]
  %s1 = inlined_call_operand.vmem [shape: f32[4,32,24], index: 1, kind: input, shape index: {}]
  %s2 = inlined_call_operand.vmem [shape: f32[4,1,24], index: 2, kind: input, shape index: {}]
  %s3 = inlined_call_operand.vmem [shape: f32[4,8,32], index: 3, kind: input, shape index: {}]
  %s4 = inlined_call_operand.vmem [shape: f32[1,32], index: 4, kind: input, shape index: {}]
  %s5 = inlined_call_operand.hbm [shape: f32[2,8,32], index: 5, kind: output, shape index: {}]
  %s6 = sld [smem:[#allocation0]]
  $region61: #{tpu_custom_call.1} parent=0
    _
  %s8 = ssub.s32 1, %s6
  %s9 = scalar_select 0, %s8, %s6
  $region1: #{tpu_custom_call.1} parent=0
    #allocation3 [shape = 'u8[8192]{0}', space=vmem, size = 0x2000, scoped, tag = 'output window, operand 0']
    #allocation4 [shape = 's32[2]{0}', space=sflag, size = 0x8, scoped, tag = 'scoped memory for tpu_custom_call.1']
    %10 = vsyncpa [#allocation4], 0
    %s11 = scalar_lea.sflag [#allocation4], 1
    %12 = vsyncpa %s11, 0
    loop: start=0, step=1, limit=10
    $region2: #{tpu_custom_call.1} parent=1 // loop_pre_header
      _
    $region3: #{tpu_custom_call.1} parent=1 // loop_header
      %s14 = sphi 0, %s18
      %p15 = scmp.ge.s32.totalorder %s14, 10
      %s21 = sphi 0, %s33
      %s22 = sphi 0, %s29
      %s23 = sphi 0, %s21
      %s24 = sphi 0, %s22
      %s25 = sphi 0, %s23
      %s26 = sphi 0, %s24
      %s36 = sphi 0, %s38
      %s39 = sphi 0, %s36
      %s40 = sphi 0, %s39
      %s56 = sphi 0, %s40
      %s62 = sphi 0, %s64
      %s65 = sphi 0, %s62
      %s66 = sphi 0, %s65
      %s82 = sphi 0, %s66
      %s88 = sphi 0, %s90
      %s91 = sphi 0, %s88
      %s92 = sphi 0, %s91
      %s108 = sphi 0, %s92
      %s114 = sphi 0, %s116
      %s117 = sphi 0, %s114
      %s118 = sphi 0, %s117
      %s134 = sphi 0, %s118
      %s138 = sphi 0, %s138
      %s140 = sphi 0, %s138
      %s141 = sphi 0, %s140
      %s155 = sphi 0, %s141
      %s161 = sphi 0, %s163
      %s164 = sphi 0, %s161
      %s165 = sphi 0, %s164
      %s181 = sphi 0, %s165
    $region4: #{tpu_custom_call.1} parent=1 // loop_header_branch
      %17 = sbr.rel (%p15) target = $region8
    $region5: #{tpu_custom_call.1} parent=1 // loop_body
      %s19 = ssub.s32 %s14, 1
      %s20 = ssub.s32 %s14, 2
      %s27 = sadd.s32 1, %s22
      %p28 = scmp.ge.s32.totalorder %s27, 4
      %s29 = scalar_select %p28, 0, %s27
      %s30 = sadd.s32 1, %s21
      %s31 = scalar_select %p28, %s30, %s21
      %p32 = scmp.ge.s32.totalorder %s31, 2
      %s33 = scalar_select %p32, 0, %s31
      %s34 = ssub.s32 %s21, %s33
      %p35 = scmp.eq.s32.totalorder %s34, 0
      %s37 = sadd.s32 %s36, 1
      %s38 = scalar_select %p35, %s36, %s37
      %p41 = pneg %p35
      %p42 = scmp.eq.s32.totalorder %s14, 7
      %p43 = por %p41, %p42
      %p44 = scmp.ne.s32.totalorder %s36, %s39
      %p45 = scmp.eq.s32.totalorder %s14, 0
      %p46 = por %p44, %p45
      %p47 = scmp.ne.s32.totalorder %s36, %s39
      %p48 = scmp.eq.s32.totalorder %s19, 7
      %p49 = por %p47, %p48
      %p50 = scmp.ne.s32.totalorder %s39, %s40
      %p51 = scmp.eq.s32.totalorder %s19, 0
      %p52 = por %p50, %p51
      %p53 = scmp.ne.s32.totalorder %s39, %s40
      %p54 = scmp.eq.s32.totalorder %s20, 7
      %p55 = por %p53, %p54
      %p57 = scmp.ne.s32.totalorder %s40, %s56
      %p58 = scmp.eq.s32.totalorder %s20, 0
      %p59 = por %p57, %p58
      %s60 = ssub.s32 %s22, %s29
      %p61 = scmp.eq.s32.totalorder %s60, 0
      %s63 = sadd.s32 %s62, 1
      %s64 = scalar_select %p61, %s62, %s63
      %p67 = pneg %p61
      %p68 = scmp.eq.s32.totalorder %s14, 7
      %p69 = por %p67, %p68
      %p70 = scmp.ne.s32.totalorder %s62, %s65
      %p71 = scmp.eq.s32.totalorder %s14, 0
      %p72 = por %p70, %p71
      %p73 = scmp.ne.s32.totalorder %s62, %s65
      %p74 = scmp.eq.s32.totalorder %s19, 7
      %p75 = por %p73, %p74
      %p76 = scmp.ne.s32.totalorder %s65, %s66
      %p77 = scmp.eq.s32.totalorder %s19, 0
      %p78 = por %p76, %p77
      %p79 = scmp.ne.s32.totalorder %s65, %s66
      %p80 = scmp.eq.s32.totalorder %s20, 7
      %p81 = por %p79, %p80
      %p83 = scmp.ne.s32.totalorder %s66, %s82
      %p84 = scmp.eq.s32.totalorder %s20, 0
      %p85 = por %p83, %p84
      %s86 = ssub.s32 %s22, %s29
      %p87 = scmp.eq.s32.totalorder %s86, 0
      %s89 = sadd.s32 %s88, 1
      %s90 = scalar_select %p87, %s88, %s89
      %p93 = pneg %p87
      %p94 = scmp.eq.s32.totalorder %s14, 7
      %p95 = por %p93, %p94
      %p96 = scmp.ne.s32.totalorder %s88, %s91
      %p97 = scmp.eq.s32.totalorder %s14, 0
      %p98 = por %p96, %p97
      %p99 = scmp.ne.s32.totalorder %s88, %s91
      %p100 = scmp.eq.s32.totalorder %s19, 7
      %p101 = por %p99, %p100
      %p102 = scmp.ne.s32.totalorder %s91, %s92
      %p103 = scmp.eq.s32.totalorder %s19, 0
      %p104 = por %p102, %p103
      %p105 = scmp.ne.s32.totalorder %s91, %s92
      %p106 = scmp.eq.s32.totalorder %s20, 7
      %p107 = por %p105, %p106
      %p109 = scmp.ne.s32.totalorder %s92, %s108
      %p110 = scmp.eq.s32.totalorder %s20, 0
      %p111 = por %p109, %p110
      %s112 = ssub.s32 %s22, %s29
      %p113 = scmp.eq.s32.totalorder %s112, 0
      %s115 = sadd.s32 %s114, 1
      %s116 = scalar_select %p113, %s114, %s115
      %p119 = pneg %p113
      %p120 = scmp.eq.s32.totalorder %s14, 7
      %p121 = por %p119, %p120
      %p122 = scmp.ne.s32.totalorder %s114, %s117
      %p123 = scmp.eq.s32.totalorder %s14, 0
      %p124 = por %p122, %p123
      %p125 = scmp.ne.s32.totalorder %s114, %s117
      %p126 = scmp.eq.s32.totalorder %s19, 7
      %p127 = por %p125, %p126
      %p128 = scmp.ne.s32.totalorder %s117, %s118
      %p129 = scmp.eq.s32.totalorder %s19, 0
      %p130 = por %p128, %p129
      %p131 = scmp.ne.s32.totalorder %s117, %s118
      %p132 = scmp.eq.s32.totalorder %s20, 7
      %p133 = por %p131, %p132
      %p135 = scmp.ne.s32.totalorder %s118, %s134
      %p136 = scmp.eq.s32.totalorder %s20, 0
      %p137 = por %p135, %p136
      %s139 = sadd.s32 %s138, 1
      %p142 = scmp.eq.s32.totalorder %s14, 7
      %p143 = scmp.ne.s32.totalorder %s138, %s140
      %p144 = scmp.eq.s32.totalorder %s14, 0
      %p145 = por %p143, %p144
      %p146 = scmp.ne.s32.totalorder %s138, %s140
      %p147 = scmp.eq.s32.totalorder %s19, 7
      %p148 = por %p146, %p147
      %p149 = scmp.ne.s32.totalorder %s140, %s141
      %p150 = scmp.eq.s32.totalorder %s19, 0
      %p151 = por %p149, %p150
      %p152 = scmp.ne.s32.totalorder %s140, %s141
      %p153 = scmp.eq.s32.totalorder %s20, 7
      %p154 = por %p152, %p153
      %p156 = scmp.ne.s32.totalorder %s141, %s155
      %p157 = scmp.eq.s32.totalorder %s20, 0
      %p158 = por %p156, %p157
      %s159 = ssub.s32 %s21, %s33
      %p160 = scmp.eq.s32.totalorder %s159, 0
      %s162 = sadd.s32 %s161, 1
      %s163 = scalar_select %p160, %s161, %s162
      %p166 = pneg %p160
      %p167 = scmp.eq.s32.totalorder %s14, 7
      %p168 = por %p166, %p167
      %p169 = scmp.ne.s32.totalorder %s161, %s164
      %p170 = scmp.eq.s32.totalorder %s14, 0
      %p171 = por %p169, %p170
      %p172 = scmp.ne.s32.totalorder %s161, %s164
      %p173 = scmp.eq.s32.totalorder %s19, 7
      %p174 = por %p172, %p173
      %p175 = scmp.ne.s32.totalorder %s164, %s165
      %p176 = scmp.eq.s32.totalorder %s19, 0
      %p177 = por %p175, %p176
      %p178 = scmp.ne.s32.totalorder %s164, %s165
      %p179 = scmp.eq.s32.totalorder %s20, 7
      %p180 = por %p178, %p179
      %p182 = scmp.ne.s32.totalorder %s165, %s181
      %p183 = scmp.eq.s32.totalorder %s20, 0
      %p184 = por %p182, %p183
      %p185 = scmp.le.s32.totalorder 1, %s14
      %p186 = scmp.lt.s32.totalorder %s14, 9
      %p187 = pnand %p185, %p186
      %p188 = pneg %p187
      // Predicated region
      $region9: #{tpu_custom_call.1} parent=5 // pred_check
        _
      $region10: #{tpu_custom_call.1} parent=5 // pred_check_branch
        %190 = sbr.rel (%p187) target = $region12
      $region11: #{tpu_custom_call.1} parent=5 // pred_region
        %s191 = ssub.s32 %s14, 1
        // Predicated region
        $region13: #{tpu_custom_call.1} parent=11 // pred_check
          %p192 = pneg %p151
        $region14: #{tpu_custom_call.1} parent=11 // pred_check_branch
          %194 = sbr.rel (%p192) target = $region16
        $region15: #{tpu_custom_call.1} parent=11 // pred_region
          _
        $region16: #{tpu_custom_call.1} parent=11 // pred_fallthru
          _
      $region12: #{tpu_custom_call.1} parent=5 // pred_fallthru
        _
      %p195 = scmp.lt.s32.totalorder %s14, 8
      // Predicated region
      $region17: #{tpu_custom_call.1} parent=5 // pred_check
        %p196 = pneg %p195
      $region18: #{tpu_custom_call.1} parent=5 // pred_check_branch
        %198 = sbr.rel (%p196) target = $region20
      $region19: #{tpu_custom_call.1} parent=5 // pred_region
        // Predicated region
        $region21: #{tpu_custom_call.1} parent=19 // pred_check
          %p199 = pneg %p46
        $region22: #{tpu_custom_call.1} parent=19 // pred_check_branch
          %201 = sbr.rel (%p199) target = $region24
        $region23: #{tpu_custom_call.1} parent=19 // pred_region
          %p202 = scmp.lt.s32.totalorder %s21, 1
          %s203 = scalar_select %p202, %s21, 1
          %s204 = smul.addr %s203, 8
          %s205 = scalar_lea.vmem %s0, %s204
        $region24: #{tpu_custom_call.1} parent=19 // pred_fallthru
          _
        // Predicated region
        $region25: #{tpu_custom_call.1} parent=19 // pred_check
          %p206 = pneg %p72
        $region26: #{tpu_custom_call.1} parent=19 // pred_check_branch
          %208 = sbr.rel (%p206) target = $region28
        $region27: #{tpu_custom_call.1} parent=19 // pred_region
          %p209 = scmp.lt.s32.totalorder %s22, 3
          %s210 = scalar_select %p209, %s22, 3
          %s211 = smul.addr %s210, 4
          %s212 = smul.addr %s211, 8
          %s213 = scalar_lea.vmem %s1, %s212
        $region28: #{tpu_custom_call.1} parent=19 // pred_fallthru
          _
        // Predicated region
        $region29: #{tpu_custom_call.1} parent=19 // pred_check
          %p214 = pneg %p98
        $region30: #{tpu_custom_call.1} parent=19 // pred_check_branch
          %216 = sbr.rel (%p214) target = $region32
        $region31: #{tpu_custom_call.1} parent=19 // pred_region
          %p217 = scmp.lt.s32.totalorder %s22, 3
          %s218 = scalar_select %p217, %s22, 3
          %s219 = scalar_lea.vmem %s2, %s218
        $region32: #{tpu_custom_call.1} parent=19 // pred_fallthru
          _
        // Predicated region
        $region33: #{tpu_custom_call.1} parent=19 // pred_check
          %p220 = pneg %p124
        $region34: #{tpu_custom_call.1} parent=19 // pred_check_branch
          %222 = sbr.rel (%p220) target = $region36
        $region35: #{tpu_custom_call.1} parent=19 // pred_region
          %p223 = scmp.lt.s32.totalorder %s22, 3
          %s224 = scalar_select %p223, %s22, 3
          %s225 = smul.addr %s224, 8
          %s226 = scalar_lea.vmem %s3, %s225
        $region36: #{tpu_custom_call.1} parent=19 // pred_fallthru
          _
      $region20: #{tpu_custom_call.1} parent=5 // pred_fallthru
        _
      %p227 = scmp.le.s32.totalorder 1, %s14
      %p228 = scmp.lt.s32.totalorder %s14, 9
      %p229 = pnand %p227, %p228
      %p230 = pneg %p229
      // Predicated region
      $region37: #{tpu_custom_call.1} parent=5 // pred_check
        _
      $region38: #{tpu_custom_call.1} parent=5 // pred_check_branch
        %232 = sbr.rel (%p229) target = $region40
      $region39: #{tpu_custom_call.1} parent=5 // pred_region
        %s233 = ssub.s32 %s14, 1
        %p234 = scmp.lt.s32.totalorder %s23, 1
        %s235 = scalar_select %p234, %s23, 1
        %s236 = smul.addr %s235, 8
        %s237 = scalar_lea.vmem %s0, %s236
        %p238 = pneg %p52
        %p239 = pneg %p49
        %p240 = scmp.lt.s32.totalorder %s24, 3
        %s241 = scalar_select %p240, %s24, 3
        %s242 = smul.addr %s241, 4
        %s243 = smul.addr %s242, 8
        %s244 = scalar_lea.vmem %s1, %s243
        %p245 = pneg %p78
        %p246 = pneg %p75
        %p247 = scmp.lt.s32.totalorder %s24, 3
        %s248 = scalar_select %p247, %s24, 3
        %s249 = scalar_lea.vmem %s2, %s248
        %p250 = pneg %p104
        %p251 = pneg %p101
        %p252 = scmp.lt.s32.totalorder %s24, 3
        %s253 = scalar_select %p252, %s24, 3
        %s254 = smul.addr %s253, 8
        %s255 = scalar_lea.vmem %s3, %s254
        %p256 = pneg %p130
        %p257 = pneg %p127
        %p258 = pneg %p151
        %p259 = pneg %p148
        %p260 = pneg %p177
        %p261 = pneg %p174
        %s262 = sand.u32 %s164, 1
        %s263 = scalar_lea.sflag [#allocation4], %s262
        %s264 = sand.u32 %s164, 1
        %s265 = smul.addr %s264, 8
        %s266 = scalar_lea.vmem [#allocation3], %s265
        %p267 = scmp.lt.s32.totalorder %s23, 1
        %s268 = scalar_select %p267, %s23, 1
        %s269 = smul.addr %s268, 8
        %s270 = scalar_lea.vmem %s0, %s269
        %p271 = scmp.lt.s32.totalorder %s24, 3
        %s272 = scalar_select %p271, %s24, 3
        %s273 = smul.addr %s272, 4
        %s274 = smul.addr %s273, 8
        %s275 = scalar_lea.vmem %s1, %s274
        %p276 = scmp.lt.s32.totalorder %s24, 3
        %s277 = scalar_select %p276, %s24, 3
        %s278 = scalar_lea.vmem %s2, %s277
        %p279 = scmp.lt.s32.totalorder %s24, 3
        %s280 = scalar_select %p279, %s24, 3
        %s281 = smul.addr %s280, 8
        %s282 = scalar_lea.vmem %s3, %s281
        %p283 = scmp.eq.s32.totalorder %s24, 0
        // Predicated region
        $region41: #{tpu_custom_call.1} parent=39 // pred_check
          %p284 = pneg %p283
        $region42: #{tpu_custom_call.1} parent=39 // pred_check_branch
          %286 = sbr.rel (%p284) target = $region44
        $region43: #{tpu_custom_call.1} parent=39 // pred_region
          %vm287 = vcmask 261120
          %288 = vst.msk [vmem:[#allocation2] sm:$0xff] %vm287, 0.0
        $region44: #{tpu_custom_call.1} parent=39 // pred_fallthru
          _
        %v289 = vld [vmem:[%s270] sm:$0xff]
        %v290 = vld [vmem:[%s275] sm:$0xff]
        %v291 = vld [vmem:[%s275 + $0x8] sm:$0xff]
        %v292 = vld [vmem:[%s275 + $0x10] sm:$0xff]
        %v293 = vld [vmem:[%s275 + $0x18] sm:$0xff]
        %v294 = vld [vmem:[%s278] sm:$0x1]
        %v296 = vlaneseq
        %v297 = vshrl.u32 %v296, 7
        %v298 = vsub.s32 0, %v297
        %v299 = vrot.slane %v294, %v298
        %vm301 = vcmask 261120
        %v303 = vsel %vm301, %v289, 0
        %305 = vmatprep.subr.mxu0 0.0
        %306 = vmatpush1.msra.mxu0 %v290
        %307 = vmatprep.subr.mxu0 0.0
        %308 = vmatpush1.msra.mxu0 %v291
        %309 = vmatprep.subr.mxu0 0.0
        %310 = vmatpush1.msra.mxu0 %v292
        %311 = vmatprep.subr.mxu0 0.0
        %312 = vmatpush1.msra.mxu0 %v293
        %313 = vmatprep.subr.mxu0 0.0
        %314 = vmatpush1.msra.mxu0 0.0
        %315 = vmatprep.subr.mxu0 0.0
        %316 = vmatpush1.msra.mxu0 0.0
        %317 = vmatprep.subr.mxu0 0.0
        %318 = vmatpush1.msra.mxu0 0.0
        %319 = vmatprep.subr.mxu0 0.0
        %320 = vmatpush1.msra.mxu0 0.0
        %321 = vmatprep.subr.mxu0 0.0
        %322 = vmatpush1.msra.mxu0 0.0
        %323 = vmatprep.subr.mxu0 0.0
        %324 = vmatpush1.msra.mxu0 0.0
        %325 = vmatprep.subr.mxu0 0.0
        %326 = vmatpush1.msra.mxu0 0.0
        %327 = vmatprep.subr.mxu0 0.0
        %328 = vmatpush1.msra.mxu0 0.0
        %329 = vmatprep.subr.mxu0 0.0
        %330 = vmatpush1.msra.mxu0 0.0
        %331 = vmatprep.subr.mxu0 0.0
        %332 = vmatpush1.msra.mxu0 0.0
        %333 = vmatprep.subr.mxu0 0.0
        %334 = vmatpush1.msra.mxu0 0.0
        %335 = vmatprep.subr.mxu0 0.0
        %336 = vmatpush1.msra.mxu0 0.0
        %337 = vmatprep.subr.mxu0 0.0
        %338 = vmatpush1.msra.mxu0 0.0
        %339 = vmatprep.subr.mxu0 0.0
        %340 = vmatpush1.msra.mxu0 0.0
        %341 = vmatprep.subr.mxu0 0.0
        %342 = vmatpush1.msra.mxu0 0.0
        %343 = vmatprep.subr.mxu0 0.0
        %344 = vmatpush1.msra.mxu0 0.0
        %345 = vmatprep.subr.mxu0 0.0
        %346 = vmatpush1.msra.mxu0 0.0
        %347 = vmatprep.subr.mxu0 0.0
        %348 = vmatpush1.msra.mxu0 0.0
        %349 = vmatprep.subr.mxu0 0.0
        %350 = vmatpush1.msra.mxu0 0.0
        %351 = vmatprep.subr.mxu0 0.0
        %352 = vmatpush1.msra.mxu0 0.0
        %353 = vmatprep.subr.mxu0 0.0
        %354 = vmatpush1.msra.mxu0 0.0
        %355 = vmatprep.subr.mxu0 0.0
        %356 = vmatpush1.msra.mxu0 0.0
        %357 = vmatprep.subr.mxu0 0.0
        %358 = vmatpush1.msra.mxu0 0.0
        %359 = vmatprep.subr.mxu0 0.0
        %360 = vmatpush1.msra.mxu0 0.0
        %361 = vmatprep.subr.mxu0 0.0
        %362 = vmatpush1.msra.mxu0 0.0
        %363 = vmatprep.subr.mxu0 0.0
        %364 = vmatpush1.msra.mxu0 0.0
        %365 = vmatprep.subr.mxu0 0.0
        %366 = vmatpush1.msra.mxu0 0.0
        %367 = vmatprep.subr.mxu0 0.0
        %368 = vmatpush1.msra.mxu0 0.0
        %369 = vmatprep.mubr.f32.mxu0 0.0
        %370 = vmatmul.mubr.f32.gmra.mrb[0].mxu0 %v303
        %v371 = vpop.f32.mrb[0].mxu0
        %v372 = vadd.f32 %v299, %v371
        %v373 = vpop.f32.mrb[0].mxu0
        %374 = vdwg.mxu0
        %v375 = vmul.f32 %v372, 0.35355338
        %377 = vrot.lane.b32.xlu0 %v372, 120
        %v378 = vpop.permute.xlu0 %377
        %vm379 = vcmask 64512
        %v381 = vsel %vm379, %v375, 0
        %v383 = vsel %vm379, %v378, 0
        %385 = vmatprep.subr.mxu0 0.0
        %386 = vmatpush1.xpose.msra.mxu0 %v383
        %387 = vmatprep.subr.mxu0 0.0
        %388 = vmatpush1.xpose.msra.mxu0 0.0
        %389 = vmatprep.subr.mxu0 0.0
        %390 = vmatpush1.xpose.msra.mxu0 0.0
        %391 = vmatprep.subr.mxu0 0.0
        %392 = vmatpush1.xpose.msra.mxu0 0.0
        %393 = vmatprep.subr.mxu0 0.0
        %394 = vmatpush1.xpose.msra.mxu0 0.0
        %395 = vmatprep.subr.mxu0 0.0
        %396 = vmatpush1.xpose.msra.mxu0 0.0
        %397 = vmatprep.subr.mxu0 0.0
        %398 = vmatpush1.xpose.msra.mxu0 0.0
        %399 = vmatprep.subr.mxu0 0.0
        %400 = vmatpush1.xpose.msra.mxu0 0.0
        %401 = vmatprep.subr.mxu0 0.0
        %402 = vmatpush1.xpose.msra.mxu0 0.0
        %403 = vmatprep.subr.mxu0 0.0
        %404 = vmatpush1.xpose.msra.mxu0 0.0
        %405 = vmatprep.subr.mxu0 0.0
        %406 = vmatpush1.xpose.msra.mxu0 0.0
        %407 = vmatprep.subr.mxu0 0.0
        %408 = vmatpush1.xpose.msra.mxu0 0.0
        %409 = vmatprep.subr.mxu0 0.0
        %410 = vmatpush1.xpose.msra.mxu0 0.0
        %411 = vmatprep.subr.mxu0 0.0
        %412 = vmatpush1.xpose.msra.mxu0 0.0
        %413 = vmatprep.subr.mxu0 0.0
        %414 = vmatpush1.xpose.msra.mxu0 0.0
        %415 = vmatprep.subr.mxu0 0.0
        %416 = vmatpush1.xpose.msra.mxu0 0.0
        %417 = vmatprep.subr.mxu0 0.0
        %418 = vmatpush1.xpose.msra.mxu0 0.0
        %419 = vmatprep.subr.mxu0 0.0
        %420 = vmatpush1.xpose.msra.mxu0 0.0
        %421 = vmatprep.subr.mxu0 0.0
        %422 = vmatpush1.xpose.msra.mxu0 0.0
        %423 = vmatprep.subr.mxu0 0.0
        %424 = vmatpush1.xpose.msra.mxu0 0.0
        %425 = vmatprep.subr.mxu0 0.0
        %426 = vmatpush1.xpose.msra.mxu0 0.0
        %427 = vmatprep.subr.mxu0 0.0
        %428 = vmatpush1.xpose.msra.mxu0 0.0
        %429 = vmatprep.subr.mxu0 0.0
        %430 = vmatpush1.xpose.msra.mxu0 0.0
        %431 = vmatprep.subr.mxu0 0.0
        %432 = vmatpush1.xpose.msra.mxu0 0.0
        %433 = vmatprep.subr.mxu0 0.0
        %434 = vmatpush1.xpose.msra.mxu0 0.0
        %435 = vmatprep.subr.mxu0 0.0
        %436 = vmatpush1.xpose.msra.mxu0 0.0
        %437 = vmatprep.subr.mxu0 0.0
        %438 = vmatpush1.xpose.msra.mxu0 0.0
        %439 = vmatprep.subr.mxu0 0.0
        %440 = vmatpush1.xpose.msra.mxu0 0.0
        %441 = vmatprep.subr.mxu0 0.0
        %442 = vmatpush1.xpose.msra.mxu0 0.0
        %443 = vmatprep.subr.mxu0 0.0
        %444 = vmatpush1.xpose.msra.mxu0 0.0
        %445 = vmatprep.subr.mxu0 0.0
        %446 = vmatpush1.xpose.msra.mxu0 0.0
        %447 = vmatprep.subr.mxu0 0.0
        %448 = vmatpush1.xpose.msra.mxu0 0.0
        %449 = vmatprep.mubr.f32.mxu0 0.0
        %450 = vmatmul.mubr.f32.gmra.mrb[0].mxu0 %v381
        %v451 = vpop.f32.mrb[0].mxu0
        %v452 = vadd.f32 0.0, %v451
        %v453 = vpop.f32.mrb[0].mxu0
        %454 = vdwg.mxu0
        %v455 = vsel %vm379, %v452, -inf
        %456 = vmax.xlane.f32.xlu0 %v455
        %v457 = vpop.xlane.xlu0 %456
        %v458 = vsub.f32 %v452, %v457
        %v459 = vmul.f32 %v458, 1.442695
        %v460 = vpow.pop %v459
        %v461 = vsel %vm379, %v460, 0.0
        %462 = vadd.xlane.f32.xlu0 %v461
        %v463 = vpop.xlane.xlu0 %462
        %v464 = vrcp.pop %v463
        %465 = vrot.lane.b32.xlu0 %v372, 112
        %v466 = vpop.permute.xlu0 %465
        %v469 = vsel %vm379, %v460, 0
        %471 = vmatprep.subr.mxu0 0.0
        %472 = vmatpush1.msra.mxu0 %v466
        %473 = vmatprep.subr.mxu0 0.0
        %474 = vmatpush1.msra.mxu0 0.0
        %475 = vmatprep.subr.mxu0 0.0
        %476 = vmatpush1.msra.mxu0 0.0
        %477 = vmatprep.subr.mxu0 0.0
        %478 = vmatpush1.msra.mxu0 0.0
        %479 = vmatprep.subr.mxu0 0.0
        %480 = vmatpush1.msra.mxu0 0.0
        %481 = vmatprep.subr.mxu0 0.0
        %482 = vmatpush1.msra.mxu0 0.0
        %483 = vmatprep.subr.mxu0 0.0
        %484 = vmatpush1.msra.mxu0 0.0
        %485 = vmatprep.subr.mxu0 0.0
        %486 = vmatpush1.msra.mxu0 0.0
        %487 = vmatprep.subr.mxu0 0.0
        %488 = vmatpush1.msra.mxu0 0.0
        %489 = vmatprep.subr.mxu0 0.0
        %490 = vmatpush1.msra.mxu0 0.0
        %491 = vmatprep.subr.mxu0 0.0
        %492 = vmatpush1.msra.mxu0 0.0
        %493 = vmatprep.subr.mxu0 0.0
        %494 = vmatpush1.msra.mxu0 0.0
        %495 = vmatprep.subr.mxu0 0.0
        %496 = vmatpush1.msra.mxu0 0.0
        %497 = vmatprep.subr.mxu0 0.0
        %498 = vmatpush1.msra.mxu0 0.0
        %499 = vmatprep.subr.mxu0 0.0
        %500 = vmatpush1.msra.mxu0 0.0
        %501 = vmatprep.subr.mxu0 0.0
        %502 = vmatpush1.msra.mxu0 0.0
        %503 = vmatprep.subr.mxu0 0.0
        %504 = vmatpush1.msra.mxu0 0.0
        %505 = vmatprep.subr.mxu0 0.0
        %506 = vmatpush1.msra.mxu0 0.0
        %507 = vmatprep.subr.mxu0 0.0
        %508 = vmatpush1.msra.mxu0 0.0
        %509 = vmatprep.subr.mxu0 0.0
        %510 = vmatpush1.msra.mxu0 0.0
        %511 = vmatprep.subr.mxu0 0.0
        %512 = vmatpush1.msra.mxu0 0.0
        %513 = vmatprep.subr.mxu0 0.0
        %514 = vmatpush1.msra.mxu0 0.0
        %515 = vmatprep.subr.mxu0 0.0
        %516 = vmatpush1.msra.mxu0 0.0
        %517 = vmatprep.subr.mxu0 0.0
        %518 = vmatpush1.msra.mxu0 0.0
        %519 = vmatprep.subr.mxu0 0.0
        %520 = vmatpush1.msra.mxu0 0.0
        %521 = vmatprep.subr.mxu0 0.0
        %522 = vmatpush1.msra.mxu0 0.0
        %523 = vmatprep.subr.mxu0 0.0
        %524 = vmatpush1.msra.mxu0 0.0
        %525 = vmatprep.subr.mxu0 0.0
        %526 = vmatpush1.msra.mxu0 0.0
        %527 = vmatprep.subr.mxu0 0.0
        %528 = vmatpush1.msra.mxu0 0.0
        %529 = vmatprep.subr.mxu0 0.0
        %530 = vmatpush1.msra.mxu0 0.0
        %531 = vmatprep.subr.mxu0 0.0
        %532 = vmatpush1.msra.mxu0 0.0
        %533 = vmatprep.subr.mxu0 0.0
        %534 = vmatpush1.msra.mxu0 0.0
        %535 = vmatprep.mubr.f32.mxu0 0.0
        %536 = vmatmul.mubr.f32.gmra.mrb[0].mxu0 %v469
        %v537 = vpop.f32.mrb[0].mxu0
        %v538 = vadd.f32 0.0, %v537
        %v539 = vpop.f32.mrb[0].mxu0
        %540 = vdwg.mxu0
        %v541 = vmul.f32 %v538, %v464
        %v542 = vld [vmem:[#allocation2] sm:$0xff]
        %v543 = vld [vmem:[%s282] sm:$0xff]
        %v545 = vsel %vm379, %v541, 0
        %547 = vmatprep.subr.mxu0 0.0
        %548 = vmatpush1.msra.mxu0 %v543
        %549 = vmatprep.subr.mxu0 0.0
        %550 = vmatpush1.msra.mxu0 0.0
        %551 = vmatprep.subr.mxu0 0.0
        %552 = vmatpush1.msra.mxu0 0.0
        %553 = vmatprep.subr.mxu0 0.0
        %554 = vmatpush1.msra.mxu0 0.0
        %555 = vmatprep.subr.mxu0 0.0
        %556 = vmatpush1.msra.mxu0 0.0
        %557 = vmatprep.subr.mxu0 0.0
        %558 = vmatpush1.msra.mxu0 0.0
        %559 = vmatprep.subr.mxu0 0.0
        %560 = vmatpush1.msra.mxu0 0.0
        %561 = vmatprep.subr.mxu0 0.0
        %562 = vmatpush1.msra.mxu0 0.0
        %563 = vmatprep.subr.mxu0 0.0
        %564 = vmatpush1.msra.mxu0 0.0
        %565 = vmatprep.subr.mxu0 0.0
        %566 = vmatpush1.msra.mxu0 0.0
        %567 = vmatprep.subr.mxu0 0.0
        %568 = vmatpush1.msra.mxu0 0.0
        %569 = vmatprep.subr.mxu0 0.0
        %570 = vmatpush1.msra.mxu0 0.0
        %571 = vmatprep.subr.mxu0 0.0
        %572 = vmatpush1.msra.mxu0 0.0
        %573 = vmatprep.subr.mxu0 0.0
        %574 = vmatpush1.msra.mxu0 0.0
        %575 = vmatprep.subr.mxu0 0.0
        %576 = vmatpush1.msra.mxu0 0.0
        %577 = vmatprep.subr.mxu0 0.0
        %578 = vmatpush1.msra.mxu0 0.0
        %579 = vmatprep.subr.mxu0 0.0
        %580 = vmatpush1.msra.mxu0 0.0
        %581 = vmatprep.subr.mxu0 0.0
        %582 = vmatpush1.msra.mxu0 0.0
        %583 = vmatprep.subr.mxu0 0.0
        %584 = vmatpush1.msra.mxu0 0.0
        %585 = vmatprep.subr.mxu0 0.0
        %586 = vmatpush1.msra.mxu0 0.0
        %587 = vmatprep.subr.mxu0 0.0
        %588 = vmatpush1.msra.mxu0 0.0
        %589 = vmatprep.subr.mxu0 0.0
        %590 = vmatpush1.msra.mxu0 0.0
        %591 = vmatprep.subr.mxu0 0.0
        %592 = vmatpush1.msra.mxu0 0.0
        %593 = vmatprep.subr.mxu0 0.0
        %594 = vmatpush1.msra.mxu0 0.0
        %595 = vmatprep.subr.mxu0 0.0
        %596 = vmatpush1.msra.mxu0 0.0
        %597 = vmatprep.subr.mxu0 0.0
        %598 = vmatpush1.msra.mxu0 0.0
        %599 = vmatprep.subr.mxu0 0.0
        %600 = vmatpush1.msra.mxu0 0.0
        %601 = vmatprep.subr.mxu0 0.0
        %602 = vmatpush1.msra.mxu0 0.0
        %603 = vmatprep.subr.mxu0 0.0
        %604 = vmatpush1.msra.mxu0 0.0
        %605 = vmatprep.subr.mxu0 0.0
        %606 = vmatpush1.msra.mxu0 0.0
        %607 = vmatprep.subr.mxu0 0.0
        %608 = vmatpush1.msra.mxu0 0.0
        %609 = vmatprep.subr.mxu0 0.0
        %610 = vmatpush1.msra.mxu0 0.0
        %611 = vmatprep.mubr.f32.mxu0 0.0
        %612 = vmatmul.mubr.f32.gmra.mrb[0].mxu0 %v545
        %v613 = vpop.f32.mrb[0].mxu0
        %v614 = vadd.f32 0.0, %v613
        %v615 = vpop.f32.mrb[0].mxu0
        %616 = vdwg.mxu0
        %v617 = vadd.f32 %v542, %v614
        %618 = vst.msk [vmem:[#allocation2] sm:$0xff] %vm301, %v617
        %p619 = scmp.eq.s32.totalorder %s24, 3
        // Predicated region
        $region45: #{tpu_custom_call.1} parent=39 // pred_check
          %p620 = pneg %p619
        $region46: #{tpu_custom_call.1} parent=39 // pred_check_branch
          %622 = sbr.rel (%p620) target = $region48
        $region47: #{tpu_custom_call.1} parent=39 // pred_region
          %v623 = vld [vmem:[#allocation2] sm:$0xff]
          %v624 = vld [vmem:[%s4] sm:$0x1]
          %v626 = vlaneseq
          %v627 = vshrl.u32 %v626, 7
          %v628 = vsub.s32 0, %v627
          %v629 = vrot.slane %v624, %v628
          %v631 = vadd.f32 %v623, %v629
          %632 = vst.msk [vmem:[%s266] sm:$0xff] %vm301, %v631
        $region48: #{tpu_custom_call.1} parent=39 // pred_fallthru
          _
        %s633 = sand.u32 %s164, 1
        %s634 = scalar_lea.sflag [#allocation4], %s633
        %s635 = sand.u32 %s164, 1
        %s636 = smul.addr %s635, 8
        %s637 = scalar_lea.vmem [#allocation3], %s636
        // Predicated region
        $region49: #{tpu_custom_call.1} parent=39 // pred_check
          %p638 = pneg %p174
        $region50: #{tpu_custom_call.1} parent=39 // pred_check_branch
          %640 = sbr.rel (%p638) target = $region52
        $region51: #{tpu_custom_call.1} parent=39 // pred_region
          %s642 = ssub.s32 128, 128
          %643 = vsyncadd %s634, %s642
          %s644 = smul.addr %s23, 128
          %s645 = scalar_lea.hbm %s5, %s644
          %s647 = sshll.u32 %s637, 4
          %s648 = int_to_ptr.vmem [resolvable:$true] %s647
          %650 = dma.vmem_to_hbm [thread:$0]  %s648, 128, %s645, %s634
        $region52: #{tpu_custom_call.1} parent=39 // pred_fallthru
          _
      $region40: #{tpu_custom_call.1} parent=5 // pred_fallthru
        _
      %p651 = scmp.le.s32.totalorder 2, %s14
      // Predicated region
      $region53: #{tpu_custom_call.1} parent=5 // pred_check
        %p652 = pneg %p651
      $region54: #{tpu_custom_call.1} parent=5 // pred_check_branch
        %654 = sbr.rel (%p652) target = $region56
      $region55: #{tpu_custom_call.1} parent=5 // pred_region
        %s655 = ssub.s32 %s14, 2
        // Predicated region
        $region57: #{tpu_custom_call.1} parent=55 // pred_check
          %p656 = pneg %p180
        $region58: #{tpu_custom_call.1} parent=55 // pred_check_branch
          %658 = sbr.rel (%p656) target = $region60
        $region59: #{tpu_custom_call.1} parent=55 // pred_region
          %s659 = sand.u32 %s165, 1
          %s660 = scalar_lea.sflag [#allocation4], %s659
          %s661 = sand.u32 %s165, 1
          %s662 = smul.addr %s661, 8
          %s663 = scalar_lea.vmem [#allocation3], %s662
          %664 = dma.done %s660, 128
        $region60: #{tpu_custom_call.1} parent=55 // pred_fallthru
          _
      $region56: #{tpu_custom_call.1} parent=5 // pred_fallthru
        _
    $region6: #{tpu_custom_call.1} parent=1 // loop_footer
      %s18 = sadd.s32 1, %s14
    $region7: #{tpu_custom_call.1} parent=1 // loop_footer_branch
      %13 = sbr.rel target = $region3
    $region8: #{tpu_custom_call.1} parent=1 // loop_exit
      _
    %665 = vsyncpa [#allocation4], 1
    %s666 = scalar_lea.sflag [#allocation4], 1
    %667 = vsyncpa %s666, 1

</llo_original>
